<compile_context>
chip_gen: v5e
topology: v5e:2x2
jax: 0.10.0
libtpu: 0.0.40
codegen_flags: <defaults>
</compile_context>

<pallas_src>
import jax
import jax.numpy as jnp
from jax import lax
from jax.experimental import pallas as pl
from jax.experimental.pallas import tpu as pltpu


def _bottleneck_kernel(x_ref, w1_ref, w2_ref, w3_ref, sb_ref, out_ref):
    """One batch tile of the fused bottleneck.

    x_ref  : (B, H, W, Cin)  bf16 activations, Cin == 4 * P
    w1_ref : (Cin, P)        bf16 1x1 conv as matmul
    w2_ref : (3, 3P, P)      bf16 3x3 conv taps; w2_ref[ky] row = kx*P + cin
    w3_ref : (P, Cin)        bf16 1x1 conv as matmul
    sb_ref : (6, Cin)        f32 rows: s1, b1, s2, b2 (first P lanes), s3, b3
    out_ref: (B, H, W, Cin)  bf16 (or caller-chosen dtype)
    """
    B, H, W, Cin = x_ref.shape
    P = w1_ref.shape[1]
    M = B * H * W

    s1 = sb_ref[0:1, 0:P]
    b1 = sb_ref[1:2, 0:P]
    s2 = sb_ref[2:3, 0:P]
    b2 = sb_ref[3:4, 0:P]
    s3 = sb_ref[4:5, :]
    b3 = sb_ref[5:6, :]

    x = x_ref[...]                                       # (B, H, W, Cin) bf16

    # ---- conv1 (1x1) + bn1 + relu : one MXU matmul over all pixels.
    h1 = jnp.dot(x.reshape(M, Cin), w1_ref[...],
                 preferred_element_type=jnp.float32)
    h1 = jnp.maximum(h1 * s1 + b1, 0.0).astype(jnp.bfloat16)
    h1 = h1.reshape(B, H, W, P)

    # ---- conv2 (3x3, stride 1, pad 1): zero padding is built in VMEM by
    # concatenating zero rows/columns, then 3 accumulating matmuls of
    # K = 3P (one per kernel row ky).  Only an (M, 3P) im2col temp is live
    # at a time.
    zrow = jnp.zeros((B, 1, W + 2, P), h1.dtype)
    zcol = jnp.zeros((B, H, 1, P), h1.dtype)
    slab = jnp.concatenate([zcol, h1, zcol], axis=2)     # (B, H, W+2, P)
    slab = jnp.concatenate([zrow, slab, zrow], axis=1)   # (B, H+2, W+2, P)

    acc = jnp.zeros((M, P), jnp.float32)
    for ky in range(3):
        patch = jnp.concatenate(
            [slab[:, ky:ky + H, kx:kx + W, :].reshape(M, P) for kx in range(3)],
            axis=-1)                                     # (M, 3P)
        acc = acc + jnp.dot(patch, w2_ref[ky],
                            preferred_element_type=jnp.float32)
    h2 = jnp.maximum(acc * s2 + b2, 0.0)

    # ---- conv3 (1x1) + bn3
    h3 = jnp.dot(h2.astype(jnp.bfloat16), w3_ref[...],
                 preferred_element_type=jnp.float32)
    h3 = h3 * s3 + b3

    # ---- identity residual (stride = 1, downsample = None) + relu, in f32;
    # cast only at the store (output is lane-dense: last dim == Cin).
    res = x.reshape(M, Cin).astype(jnp.float32)
    out = jnp.maximum(h3 + res, 0.0)
    out_ref[...] = out.reshape(B, H, W, Cin).astype(out_ref.dtype)


def _fold_bn(bn, eps=1e-5):
    scale = bn["gamma"] / jnp.sqrt(bn["var"] + eps)
    bias = bn["beta"] - bn["mean"] * scale
    return scale.astype(jnp.float32), bias.astype(jnp.float32)


def _const_spec(block_shape, index_map):
    """BlockSpec for operands whose block index is constant across the grid:
    request single buffering so weights/BN params are not double-buffered."""
    if hasattr(pl, "Buffered"):
        try:
            return pl.BlockSpec(block_shape, index_map,
                                pipeline_mode=pl.Buffered(1))
        except TypeError:
            pass
    return pl.BlockSpec(block_shape, index_map)


def _vmem_limit_bytes(B, H, W, Cin, P, out_itemsize):
    """Per-step VMEM footprint estimate (activation/output blocks, weights,
    live temporaries) with 2x headroom, clamped to the smallest per-TC
    physical VMEM across supported generations (v7x: 64 MiB)."""
    M = B * H * W
    blocks = 2 * M * Cin * (2 + out_itemsize)            # x + out, double-buffered
    weights = (Cin * P + 9 * P * P + P * Cin) * 2 + 6 * Cin * 4
    temps = (M * (4 * P * 4 + 3 * P * 2 + 2 * Cin * 4)    # h1/acc/h2 f32, patch, h3/res
             + B * (H + 2) * (W + 2) * P * 2)             # padded slab bf16
    est = 2 * (blocks + weights + temps)
    return int(min(max(est, 32 * 1024 * 1024), 64 * 1024 * 1024))


def bottleneck_forward_nhwc(x_nhwc, params, *, batch_tile=1,
                            out_dtype=jnp.bfloat16):
    """Pallas-backed forward pass, NHWC activations end-to-end.

    batch_tile: images processed per grid step.  For the deep 7x7 stage use
    batch_tile >= 4 so the matmul M dimension (batch_tile*H*W) is large; keep
    the grid length >= 2 so v7x can shard steps across its two TensorCores.
    """
    x = x_nhwc.astype(jnp.bfloat16)
    N, H, W, Cin = x.shape
    w1, w2, w3 = params["w1"], params["w2"], params["w3"]
    P = w1.shape[1]
    assert Cin == 4 * P, "identity residual requires inplanes == 4 * planes"
    assert N % batch_tile == 0, "batch must be divisible by batch_tile"
    n_blk = N // batch_tile

    w1b = w1.astype(jnp.bfloat16)                        # (Cin, P)
    w2b = w2.reshape(3, 3 * P, P).astype(jnp.bfloat16)   # (3, 3P, P); row = kx*P + cin
    w3b = w3.astype(jnp.bfloat16)                        # (P, Cin)

    s1, b1 = _fold_bn(params["bn1"])
    s2, b2 = _fold_bn(params["bn2"])
    s3, b3 = _fold_bn(params["bn3"])

    def _row(v):  # lane-aligned row of width Cin (zero-padded)
        return jnp.pad(v, (0, Cin - v.shape[0]))

    sb = jnp.stack([_row(s1), _row(b1), _row(s2), _row(b2), s3, b3])   # (6, Cin)

    out = pl.pallas_call(
        _bottleneck_kernel,
        out_shape=jax.ShapeDtypeStruct((N, H, W, Cin), out_dtype),
        grid=(n_blk,),
        in_specs=[
            pl.BlockSpec((batch_tile, H, W, Cin), lambda n: (n, 0, 0, 0)),
            _const_spec((Cin, P), lambda n: (0, 0)),
            _const_spec((3, 3 * P, P), lambda n: (0, 0, 0)),
            _const_spec((P, Cin), lambda n: (0, 0)),
            _const_spec((6, Cin), lambda n: (0, 0)),
        ],
        out_specs=pl.BlockSpec((batch_tile, H, W, Cin), lambda n: (n, 0, 0, 0)),
        compiler_params=pltpu.CompilerParams(
            dimension_semantics=("parallel",),
            vmem_limit_bytes=_vmem_limit_bytes(
                batch_tile, H, W, Cin, P, jnp.dtype(out_dtype).itemsize),
        ),
    )(x, w1b, w2b, w3b, sb)
    return out


def bottleneck_forward(x_nchw, params, *, batch_tile=1, out_dtype=jnp.bfloat16):
    """NCHW (PyTorch-convention) boundary around the NHWC Pallas kernel."""
    x = jnp.transpose(x_nchw, (0, 2, 3, 1))              # NCHW -> NHWC
    out = bottleneck_forward_nhwc(x, params, batch_tile=batch_tile,
                                  out_dtype=out_dtype)
    return jnp.transpose(out, (0, 3, 1, 2))               # NHWC -> NCHW


def bottleneck_reference(x_nchw, params, eps=1e-5):
    """Pure-JAX (XLA, f32) reference for numerical verification."""
    x = jnp.transpose(x_nchw, (0, 2, 3, 1)).astype(jnp.float32)

    def bn(h, p):
        scale = p["gamma"] / jnp.sqrt(p["var"] + eps)
        return h * scale + (p["beta"] - p["mean"] * scale)

    P = params["w1"].shape[1]
    h = jnp.einsum("nhwc,cp->nhwp", x, params["w1"])
    h = jax.nn.relu(bn(h, params["bn1"]))
    w2_hwio = params["w2"].reshape(3, 3, P, P)
    h = lax.conv_general_dilated(h, w2_hwio, window_strides=(1, 1),
                                 padding="SAME",
                                 dimension_numbers=("NHWC", "HWIO", "NHWC"))
    h = jax.nn.relu(bn(h, params["bn2"]))
    h = jnp.einsum("nhwp,pc->nhwc", h, params["w3"])
    h = bn(h, params["bn3"])
    out = jax.nn.relu(h + x)
    return jnp.transpose(out, (0, 3, 1, 2))


def init_params(key, inplanes, planes):
    ks = jax.random.split(key, 6)

    def bn_params(k, c):
        k0, k1, k2, k3 = jax.random.split(k, 4)
        return {
            "gamma": jax.random.uniform(k0, (c,), jnp.float32, 0.5, 1.5),
            "beta": 0.1 * jax.random.normal(k1, (c,), jnp.float32),
            "mean": 0.1 * jax.random.normal(k2, (c,), jnp.float32),
            "var": jax.random.uniform(k3, (c,), jnp.float32, 0.5, 1.5),
        }

    return {
        "w1": 0.05 * jax.random.normal(ks[0], (inplanes, planes), jnp.float32),
        "w2": 0.05 * jax.random.normal(ks[1], (9, planes, planes), jnp.float32),
        "w3": 0.05 * jax.random.normal(ks[2], (planes, planes * 4), jnp.float32),
        "bn1": bn_params(ks[3], planes),
        "bn2": bn_params(ks[4], planes),
        "bn3": bn_params(ks[5], planes * 4),
    }


if __name__ == "__main__":
    # Small shapes consistent with the module: inplanes = 4 * planes so the
    # identity residual add is valid (default Bottleneck: 2048 = 4 * 512).
    N, H, W = 2, 8, 8
    planes, inplanes = 32, 128

    key = jax.random.PRNGKey(0)
    kx, kp = jax.random.split(key)
    x = jax.random.normal(kx, (N, inplanes, H, W), jnp.float32)   # NCHW like torch
    params = init_params(kp, inplanes, planes)

    # batch_tile=1 -> grid (2,): two parallel steps, exercises the pipeline.
    fwd = jax.jit(lambda xx, pp: bottleneck_forward(xx, pp, batch_tile=1))
    out = jax.block_until_ready(fwd(x, params))
    ref = jax.block_until_ready(bottleneck_reference(x, params))

    assert out.shape == (N, inplanes, H, W), out.shape
    out32 = out.astype(jnp.float32)
    max_diff = float(jnp.max(jnp.abs(out32 - ref)))
    assert jnp.allclose(out32, ref, atol=5e-2, rtol=5e-2), (
        "max abs diff = %e" % max_diff)
    print("KERNEL_OK")
</pallas_src>

<mosaic_0001>
module attributes {stable_mosaic.version = 11 : i64} {
  func.func @_bottleneck_kernel(%arg0: i32, %arg1: memref<1x8x8x128xbf16, #tpu.memory_space<vmem>>, %arg2: memref<128x32xbf16, #tpu.memory_space<vmem>>, %arg3: memref<3x96x32xbf16, #tpu.memory_space<vmem>>, %arg4: memref<32x128xbf16, #tpu.memory_space<vmem>>, %arg5: memref<6x128xf32, #tpu.memory_space<vmem>>, %arg6: memref<1x8x8x128xbf16, #tpu.memory_space<vmem>>) attributes {dimension_semantics = [#tpu.dimension_semantics<parallel>], iteration_bounds = array<i64: 2>, scalar_prefetch = 0 : i64, scratch_operands = 0 : i64, tpu.core_type = #tpu.core_type<tc>, window_params = [{transform_indices = @transform_0, window_bounds = array<i64: 1, 8, 8, 128>}, {pipeline_mode = #tpu.pipeline_mode<synchronous>, transform_indices = @transform_1, window_bounds = array<i64: 128, 32>}, {pipeline_mode = #tpu.pipeline_mode<synchronous>, transform_indices = @transform_2, window_bounds = array<i64: 3, 96, 32>}, {pipeline_mode = #tpu.pipeline_mode<synchronous>, transform_indices = @transform_3, window_bounds = array<i64: 32, 128>}, {pipeline_mode = #tpu.pipeline_mode<synchronous>, transform_indices = @transform_4, window_bounds = array<i64: 6, 128>}, {transform_indices = @transform_5, window_bounds = array<i64: 1, 8, 8, 128>}]} {
    %c0 = arith.constant 0 : index
    %c0_0 = arith.constant 0 : index
    %0 = vector.load %arg5[%c0, %c0_0] : memref<6x128xf32, #tpu.memory_space<vmem>>, vector<1x32xf32>
    %c1 = arith.constant 1 : index
    %c0_1 = arith.constant 0 : index
    %1 = vector.load %arg5[%c1, %c0_1] : memref<6x128xf32, #tpu.memory_space<vmem>>, vector<1x32xf32>
    %c2 = arith.constant 2 : index
    %c0_2 = arith.constant 0 : index
    %2 = vector.load %arg5[%c2, %c0_2] : memref<6x128xf32, #tpu.memory_space<vmem>>, vector<1x32xf32>
    %c3 = arith.constant 3 : index
    %c0_3 = arith.constant 0 : index
    %3 = vector.load %arg5[%c3, %c0_3] : memref<6x128xf32, #tpu.memory_space<vmem>>, vector<1x32xf32>
    %c4 = arith.constant 4 : index
    %c0_4 = arith.constant 0 : index
    %4 = vector.load %arg5[%c4, %c0_4] : memref<6x128xf32, #tpu.memory_space<vmem>>, vector<1x128xf32>
    %c5 = arith.constant 5 : index
    %c0_5 = arith.constant 0 : index
    %5 = vector.load %arg5[%c5, %c0_5] : memref<6x128xf32, #tpu.memory_space<vmem>>, vector<1x128xf32>
    %c0_6 = arith.constant 0 : index
    %c0_7 = arith.constant 0 : index
    %c0_8 = arith.constant 0 : index
    %c0_9 = arith.constant 0 : index
    %6 = vector.load %arg1[%c0_6, %c0_7, %c0_8, %c0_9] : memref<1x8x8x128xbf16, #tpu.memory_space<vmem>>, vector<1x8x8x128xbf16>
    %7 = vector.shape_cast %6 : vector<1x8x8x128xbf16> to vector<64x128xbf16>
    %c0_10 = arith.constant 0 : index
    %c0_11 = arith.constant 0 : index
    %8 = vector.load %arg2[%c0_10, %c0_11] : memref<128x32xbf16, #tpu.memory_space<vmem>>, vector<128x32xbf16>
    %cst = arith.constant dense<0.000000e+00> : vector<64x32xf32>
    %9 = tpu.matmul %7, %8, %cst {dimension_numbers = #tpu.dot_dimension_numbers<[1], [0], [0], [1], [0, 0, 1, 1], [], []>} : vector<64x128xbf16>, vector<128x32xbf16>, vector<64x32xf32> -> vector<64x32xf32>
    %10 = vector.broadcast %0 : vector<1x32xf32> to vector<64x32xf32>
    %11 = arith.mulf %9, %10 : vector<64x32xf32>
    %12 = vector.broadcast %1 : vector<1x32xf32> to vector<64x32xf32>
    %13 = arith.addf %11, %12 : vector<64x32xf32>
    %cst_12 = arith.constant 0.000000e+00 : f32
    %14 = vector.broadcast %cst_12 : f32 to vector<64x32xf32>
    %15 = arith.maximumf %13, %14 : vector<64x32xf32>
    %16 = arith.truncf %15 : vector<64x32xf32> to vector<64x32xbf16>
    %17 = vector.shape_cast %16 : vector<64x32xbf16> to vector<1x8x8x32xbf16>
    %cst_13 = arith.constant 0.000000e+00 : bf16
    %18 = vector.broadcast %cst_13 : bf16 to vector<1x1x10x32xbf16>
    %cst_14 = arith.constant 0.000000e+00 : bf16
    %19 = vector.broadcast %cst_14 : bf16 to vector<1x8x1x32xbf16>
    %20 = tpu.concatenate %19, %17, %19 in 2 : vector<1x8x1x32xbf16>, vector<1x8x8x32xbf16>, vector<1x8x1x32xbf16> -> vector<1x8x10x32xbf16>
    %21 = tpu.concatenate %18, %20, %18 in 1 : vector<1x1x10x32xbf16>, vector<1x8x10x32xbf16>, vector<1x1x10x32xbf16> -> vector<1x10x10x32xbf16>
    %cst_15 = arith.constant 0.000000e+00 : f32
    %22 = vector.broadcast %cst_15 : f32 to vector<64x32xf32>
    %23 = vector.extract_strided_slice %21 {offsets = [0, 0, 0, 0], sizes = [1, 8, 8, 32], strides = [1, 1, 1, 1]} : vector<1x10x10x32xbf16> to vector<1x8x8x32xbf16>
    %24 = vector.shape_cast %23 : vector<1x8x8x32xbf16> to vector<64x32xbf16>
    %25 = vector.extract_strided_slice %21 {offsets = [0, 0, 1, 0], sizes = [1, 8, 8, 32], strides = [1, 1, 1, 1]} : vector<1x10x10x32xbf16> to vector<1x8x8x32xbf16>
    %26 = vector.shape_cast %25 : vector<1x8x8x32xbf16> to vector<64x32xbf16>
    %27 = vector.extract_strided_slice %21 {offsets = [0, 0, 2, 0], sizes = [1, 8, 8, 32], strides = [1, 1, 1, 1]} : vector<1x10x10x32xbf16> to vector<1x8x8x32xbf16>
    %28 = vector.shape_cast %27 : vector<1x8x8x32xbf16> to vector<64x32xbf16>
    %29 = tpu.concatenate %24, %26, %28 in 1 : vector<64x32xbf16>, vector<64x32xbf16>, vector<64x32xbf16> -> vector<64x96xbf16>
    %c0_16 = arith.constant 0 : index
    %c0_17 = arith.constant 0 : index
    %c0_18 = arith.constant 0 : index
    %30 = vector.load %arg3[%c0_16, %c0_17, %c0_18] : memref<3x96x32xbf16, #tpu.memory_space<vmem>>, vector<1x96x32xbf16>
    %31 = vector.shape_cast %30 : vector<1x96x32xbf16> to vector<96x32xbf16>
    %cst_19 = arith.constant dense<0.000000e+00> : vector<64x32xf32>
    %32 = tpu.matmul %29, %31, %cst_19 {dimension_numbers = #tpu.dot_dimension_numbers<[1], [0], [0], [1], [0, 0, 1, 1], [], []>} : vector<64x96xbf16>, vector<96x32xbf16>, vector<64x32xf32> -> vector<64x32xf32>
    %33 = arith.addf %22, %32 : vector<64x32xf32>
    %34 = vector.extract_strided_slice %21 {offsets = [0, 1, 0, 0], sizes = [1, 8, 8, 32], strides = [1, 1, 1, 1]} : vector<1x10x10x32xbf16> to vector<1x8x8x32xbf16>
    %35 = vector.shape_cast %34 : vector<1x8x8x32xbf16> to vector<64x32xbf16>
    %36 = vector.extract_strided_slice %21 {offsets = [0, 1, 1, 0], sizes = [1, 8, 8, 32], strides = [1, 1, 1, 1]} : vector<1x10x10x32xbf16> to vector<1x8x8x32xbf16>
    %37 = vector.shape_cast %36 : vector<1x8x8x32xbf16> to vector<64x32xbf16>
    %38 = vector.extract_strided_slice %21 {offsets = [0, 1, 2, 0], sizes = [1, 8, 8, 32], strides = [1, 1, 1, 1]} : vector<1x10x10x32xbf16> to vector<1x8x8x32xbf16>
    %39 = vector.shape_cast %38 : vector<1x8x8x32xbf16> to vector<64x32xbf16>
    %40 = tpu.concatenate %35, %37, %39 in 1 : vector<64x32xbf16>, vector<64x32xbf16>, vector<64x32xbf16> -> vector<64x96xbf16>
    %c1_20 = arith.constant 1 : index
    %c0_21 = arith.constant 0 : index
    %c0_22 = arith.constant 0 : index
    %41 = vector.load %arg3[%c1_20, %c0_21, %c0_22] : memref<3x96x32xbf16, #tpu.memory_space<vmem>>, vector<1x96x32xbf16>
    %42 = vector.shape_cast %41 : vector<1x96x32xbf16> to vector<96x32xbf16>
    %cst_23 = arith.constant dense<0.000000e+00> : vector<64x32xf32>
    %43 = tpu.matmul %40, %42, %cst_23 {dimension_numbers = #tpu.dot_dimension_numbers<[1], [0], [0], [1], [0, 0, 1, 1], [], []>} : vector<64x96xbf16>, vector<96x32xbf16>, vector<64x32xf32> -> vector<64x32xf32>
    %44 = arith.addf %33, %43 : vector<64x32xf32>
    %45 = vector.extract_strided_slice %21 {offsets = [0, 2, 0, 0], sizes = [1, 8, 8, 32], strides = [1, 1, 1, 1]} : vector<1x10x10x32xbf16> to vector<1x8x8x32xbf16>
    %46 = vector.shape_cast %45 : vector<1x8x8x32xbf16> to vector<64x32xbf16>
    %47 = vector.extract_strided_slice %21 {offsets = [0, 2, 1, 0], sizes = [1, 8, 8, 32], strides = [1, 1, 1, 1]} : vector<1x10x10x32xbf16> to vector<1x8x8x32xbf16>
    %48 = vector.shape_cast %47 : vector<1x8x8x32xbf16> to vector<64x32xbf16>
    %49 = vector.extract_strided_slice %21 {offsets = [0, 2, 2, 0], sizes = [1, 8, 8, 32], strides = [1, 1, 1, 1]} : vector<1x10x10x32xbf16> to vector<1x8x8x32xbf16>
    %50 = vector.shape_cast %49 : vector<1x8x8x32xbf16> to vector<64x32xbf16>
    %51 = tpu.concatenate %46, %48, %50 in 1 : vector<64x32xbf16>, vector<64x32xbf16>, vector<64x32xbf16> -> vector<64x96xbf16>
    %c2_24 = arith.constant 2 : index
    %c0_25 = arith.constant 0 : index
    %c0_26 = arith.constant 0 : index
    %52 = vector.load %arg3[%c2_24, %c0_25, %c0_26] : memref<3x96x32xbf16, #tpu.memory_space<vmem>>, vector<1x96x32xbf16>
    %53 = vector.shape_cast %52 : vector<1x96x32xbf16> to vector<96x32xbf16>
    %cst_27 = arith.constant dense<0.000000e+00> : vector<64x32xf32>
    %54 = tpu.matmul %51, %53, %cst_27 {dimension_numbers = #tpu.dot_dimension_numbers<[1], [0], [0], [1], [0, 0, 1, 1], [], []>} : vector<64x96xbf16>, vector<96x32xbf16>, vector<64x32xf32> -> vector<64x32xf32>
    %55 = arith.addf %44, %54 : vector<64x32xf32>
    %56 = vector.broadcast %2 : vector<1x32xf32> to vector<64x32xf32>
    %57 = arith.mulf %55, %56 : vector<64x32xf32>
    %58 = vector.broadcast %3 : vector<1x32xf32> to vector<64x32xf32>
    %59 = arith.addf %57, %58 : vector<64x32xf32>
    %cst_28 = arith.constant 0.000000e+00 : f32
    %60 = vector.broadcast %cst_28 : f32 to vector<64x32xf32>
    %61 = arith.maximumf %59, %60 : vector<64x32xf32>
    %62 = arith.truncf %61 : vector<64x32xf32> to vector<64x32xbf16>
    %c0_29 = arith.constant 0 : index
    %c0_30 = arith.constant 0 : index
    %63 = vector.load %arg4[%c0_29, %c0_30] : memref<32x128xbf16, #tpu.memory_space<vmem>>, vector<32x128xbf16>
    %cst_31 = arith.constant dense<0.000000e+00> : vector<64x128xf32>
    %64 = tpu.matmul %62, %63, %cst_31 {dimension_numbers = #tpu.dot_dimension_numbers<[1], [0], [0], [1], [0, 0, 1, 1], [], []>} : vector<64x32xbf16>, vector<32x128xbf16>, vector<64x128xf32> -> vector<64x128xf32>
    %65 = vector.broadcast %4 : vector<1x128xf32> to vector<64x128xf32>
    %66 = arith.mulf %64, %65 : vector<64x128xf32>
    %67 = vector.broadcast %5 : vector<1x128xf32> to vector<64x128xf32>
    %68 = arith.addf %66, %67 : vector<64x128xf32>
    %69 = vector.shape_cast %6 : vector<1x8x8x128xbf16> to vector<64x128xbf16>
    %70 = arith.extf %69 : vector<64x128xbf16> to vector<64x128xf32>
    %71 = arith.addf %68, %70 : vector<64x128xf32>
    %cst_32 = arith.constant 0.000000e+00 : f32
    %72 = vector.broadcast %cst_32 : f32 to vector<64x128xf32>
    %73 = arith.maximumf %71, %72 : vector<64x128xf32>
    %74 = vector.shape_cast %73 : vector<64x128xf32> to vector<1x8x8x128xf32>
    %75 = arith.truncf %74 : vector<1x8x8x128xf32> to vector<1x8x8x128xbf16>
    %c0_33 = arith.constant 0 : index
    %c0_34 = arith.constant 0 : index
    %c0_35 = arith.constant 0 : index
    %c0_36 = arith.constant 0 : index
    %76 = vector.load %arg6[%c0_33, %c0_34, %c0_35, %c0_36] : memref<1x8x8x128xbf16, #tpu.memory_space<vmem>>, vector<1x8x8x128xbf16>
    tpu.vector_store %arg6[%c0_33, %c0_34, %c0_35, %c0_36], %75 {strides = array<i32>} : memref<1x8x8x128xbf16, #tpu.memory_space<vmem>>, vector<1x8x8x128xbf16>,
    return
  }
  func.func @transform_0(%arg0: i32) -> (i32, i32, i32, i32) {
    %c0_i32 = arith.constant 0 : i32
    %c0_i32_0 = arith.constant 0 : i32
    %c0_i32_1 = arith.constant 0 : i32
    %c0_i32_2 = arith.constant 0 : i32
    return %arg0, %c0_i32, %c0_i32_0, %c0_i32_1 : i32, i32, i32, i32
  }
  func.func @transform_1(%arg0: i32) -> (i32, i32) {
    %c0_i32 = arith.constant 0 : i32
    %c0_i32_0 = arith.constant 0 : i32
    %c0_i32_1 = arith.constant 0 : i32
    return %c0_i32, %c0_i32_0 : i32, i32
  }
  func.func @transform_2(%arg0: i32) -> (i32, i32, i32) {
    %c0_i32 = arith.constant 0 : i32
    %c0_i32_0 = arith.constant 0 : i32
    %c0_i32_1 = arith.constant 0 : i32
    %c0_i32_2 = arith.constant 0 : i32
    return %c0_i32, %c0_i32_0, %c0_i32_1 : i32, i32, i32
  }
  func.func @transform_3(%arg0: i32) -> (i32, i32) {
    %c0_i32 = arith.constant 0 : i32
    %c0_i32_0 = arith.constant 0 : i32
    %c0_i32_1 = arith.constant 0 : i32
    return %c0_i32, %c0_i32_0 : i32, i32
  }
  func.func @transform_4(%arg0: i32) -> (i32, i32) {
    %c0_i32 = arith.constant 0 : i32
    %c0_i32_0 = arith.constant 0 : i32
    %c0_i32_1 = arith.constant 0 : i32
    return %c0_i32, %c0_i32_0 : i32, i32
  }
  func.func @transform_5(%arg0: i32) -> (i32, i32, i32, i32) {
    %c0_i32 = arith.constant 0 : i32
    %c0_i32_0 = arith.constant 0 : i32
    %c0_i32_1 = arith.constant 0 : i32
    %c0_i32_2 = arith.constant 0 : i32
    return %arg0, %c0_i32, %c0_i32_0, %c0_i32_1 : i32, i32, i32, i32
  }
}

</mosaic_0001>

<llo_original>
// kernel: _lambda_.1
$region0: #{_lambda_.1}
  #allocation0 [shape = 'u32[]', space=smem, size = 0x4, offset = 0x4, fixed_abs, tag = 'smem constant byte address 0x4 - core index']
  #allocation1 [shape = 'u32[72,128]{1,0:T(1,128)}', space=vmem, size = 0x9000, scoped, tag = 'internal scratch']
  %s0 = inlined_call_operand.vmem [shape: bf16[2,8,8,128], index: 0, kind: input, shape index: {}]
  %s1 = inlined_call_operand.vmem [shape: bf16[128,32], index: 1, kind: input, shape index: {}]
  %s2 = inlined_call_operand.vmem [shape: bf16[3,96,32], index: 2, kind: input, shape index: {}]
  %s3 = inlined_call_operand.vmem [shape: bf16[32,128], index: 3, kind: input, shape index: {}]
  %s4 = inlined_call_operand.vmem [shape: f32[6,128], index: 4, kind: input, shape index: {}]
  %s5 = inlined_call_operand.hbm [shape: bf16[2,8,8,128], index: 5, kind: output, shape index: {}]
  %s6 = sld [smem:[#allocation0]]
  $region53: #{_lambda_.1} parent=0
    _
  %s8 = ssub.s32 1, %s6
  %s9 = scalar_select 0, %s8, %s6
  $region1: #{_lambda_.1} parent=0
    #allocation2 [shape = 'u8[32768]{0}', space=vmem, size = 0x8000, scoped, tag = 'output window, operand 0']
    #allocation3 [shape = 's32[2]{0}', space=sflag, size = 0x8, scoped, tag = 'scoped memory for _lambda_.1']
    %10 = vsyncpa [#allocation3], 0
    %s11 = scalar_lea.sflag [#allocation3], 1
    %12 = vsyncpa %s11, 0
    loop: start=0, step=1, limit=4
    $region2: #{_lambda_.1} parent=1 // loop_pre_header
      _
    $region3: #{_lambda_.1} parent=1 // loop_header
      %s14 = sphi 0, %s18
      %p15 = scmp.ge.s32.totalorder %s14, 4
      %s24 = sphi 0, %s26
      %s27 = sphi 0, %s24
      %s28 = sphi 0, %s27
      %s44 = sphi 0, %s28
      %s48 = sphi 0, %s48
      %s50 = sphi 0, %s48
      %s51 = sphi 0, %s50
      %s65 = sphi 0, %s51
      %s69 = sphi 0, %s69
      %s71 = sphi 0, %s69
      %s72 = sphi 0, %s71
      %s86 = sphi 0, %s72
      %s90 = sphi 0, %s90
      %s92 = sphi 0, %s90
      %s93 = sphi 0, %s92
      %s107 = sphi 0, %s93
      %s111 = sphi 0, %s111
      %s113 = sphi 0, %s111
      %s114 = sphi 0, %s113
      %s128 = sphi 0, %s114
      %s134 = sphi 0, %s136
      %s137 = sphi 0, %s134
      %s138 = sphi 0, %s137
      %s154 = sphi 0, %s138
    $region4: #{_lambda_.1} parent=1 // loop_header_branch
      %17 = sbr.rel (%p15) target = $region8
    $region5: #{_lambda_.1} parent=1 // loop_body
      %s19 = ssub.s32 %s14, 1
      %s20 = ssub.s32 %s14, 2
      %s21 = sadd.s32 %s14, 1
      %s22 = ssub.s32 %s14, %s21
      %p23 = scmp.eq.s32.totalorder %s22, 0
      %s25 = sadd.s32 %s24, 1
      %s26 = scalar_select %p23, %s24, %s25
      %p29 = pneg %p23
      %p30 = scmp.eq.s32.totalorder %s14, 1
      %p31 = por %p29, %p30
      %p32 = scmp.ne.s32.totalorder %s24, %s27
      %p33 = scmp.eq.s32.totalorder %s14, 0
      %p34 = por %p32, %p33
      %p35 = scmp.ne.s32.totalorder %s24, %s27
      %p36 = scmp.eq.s32.totalorder %s19, 1
      %p37 = por %p35, %p36
      %p38 = scmp.ne.s32.totalorder %s27, %s28
      %p39 = scmp.eq.s32.totalorder %s19, 0
      %p40 = por %p38, %p39
      %p41 = scmp.ne.s32.totalorder %s27, %s28
      %p42 = scmp.eq.s32.totalorder %s20, 1
      %p43 = por %p41, %p42
      %p45 = scmp.ne.s32.totalorder %s28, %s44
      %p46 = scmp.eq.s32.totalorder %s20, 0
      %p47 = por %p45, %p46
      %s49 = sadd.s32 %s48, 1
      %p52 = scmp.eq.s32.totalorder %s14, 1
      %p53 = scmp.ne.s32.totalorder %s48, %s50
      %p54 = scmp.eq.s32.totalorder %s14, 0
      %p55 = por %p53, %p54
      %p56 = scmp.ne.s32.totalorder %s48, %s50
      %p57 = scmp.eq.s32.totalorder %s19, 1
      %p58 = por %p56, %p57
      %p59 = scmp.ne.s32.totalorder %s50, %s51
      %p60 = scmp.eq.s32.totalorder %s19, 0
      %p61 = por %p59, %p60
      %p62 = scmp.ne.s32.totalorder %s50, %s51
      %p63 = scmp.eq.s32.totalorder %s20, 1
      %p64 = por %p62, %p63
      %p66 = scmp.ne.s32.totalorder %s51, %s65
      %p67 = scmp.eq.s32.totalorder %s20, 0
      %p68 = por %p66, %p67
      %s70 = sadd.s32 %s69, 1
      %p73 = scmp.eq.s32.totalorder %s14, 1
      %p74 = scmp.ne.s32.totalorder %s69, %s71
      %p75 = scmp.eq.s32.totalorder %s14, 0
      %p76 = por %p74, %p75
      %p77 = scmp.ne.s32.totalorder %s69, %s71
      %p78 = scmp.eq.s32.totalorder %s19, 1
      %p79 = por %p77, %p78
      %p80 = scmp.ne.s32.totalorder %s71, %s72
      %p81 = scmp.eq.s32.totalorder %s19, 0
      %p82 = por %p80, %p81
      %p83 = scmp.ne.s32.totalorder %s71, %s72
      %p84 = scmp.eq.s32.totalorder %s20, 1
      %p85 = por %p83, %p84
      %p87 = scmp.ne.s32.totalorder %s72, %s86
      %p88 = scmp.eq.s32.totalorder %s20, 0
      %p89 = por %p87, %p88
      %s91 = sadd.s32 %s90, 1
      %p94 = scmp.eq.s32.totalorder %s14, 1
      %p95 = scmp.ne.s32.totalorder %s90, %s92
      %p96 = scmp.eq.s32.totalorder %s14, 0
      %p97 = por %p95, %p96
      %p98 = scmp.ne.s32.totalorder %s90, %s92
      %p99 = scmp.eq.s32.totalorder %s19, 1
      %p100 = por %p98, %p99
      %p101 = scmp.ne.s32.totalorder %s92, %s93
      %p102 = scmp.eq.s32.totalorder %s19, 0
      %p103 = por %p101, %p102
      %p104 = scmp.ne.s32.totalorder %s92, %s93
      %p105 = scmp.eq.s32.totalorder %s20, 1
      %p106 = por %p104, %p105
      %p108 = scmp.ne.s32.totalorder %s93, %s107
      %p109 = scmp.eq.s32.totalorder %s20, 0
      %p110 = por %p108, %p109
      %s112 = sadd.s32 %s111, 1
      %p115 = scmp.eq.s32.totalorder %s14, 1
      %p116 = scmp.ne.s32.totalorder %s111, %s113
      %p117 = scmp.eq.s32.totalorder %s14, 0
      %p118 = por %p116, %p117
      %p119 = scmp.ne.s32.totalorder %s111, %s113
      %p120 = scmp.eq.s32.totalorder %s19, 1
      %p121 = por %p119, %p120
      %p122 = scmp.ne.s32.totalorder %s113, %s114
      %p123 = scmp.eq.s32.totalorder %s19, 0
      %p124 = por %p122, %p123
      %p125 = scmp.ne.s32.totalorder %s113, %s114
      %p126 = scmp.eq.s32.totalorder %s20, 1
      %p127 = por %p125, %p126
      %p129 = scmp.ne.s32.totalorder %s114, %s128
      %p130 = scmp.eq.s32.totalorder %s20, 0
      %p131 = por %p129, %p130
      %s132 = ssub.s32 %s14, %s21
      %p133 = scmp.eq.s32.totalorder %s132, 0
      %s135 = sadd.s32 %s134, 1
      %s136 = scalar_select %p133, %s134, %s135
      %p139 = pneg %p133
      %p140 = scmp.eq.s32.totalorder %s14, 1
      %p141 = por %p139, %p140
      %p142 = scmp.ne.s32.totalorder %s134, %s137
      %p143 = scmp.eq.s32.totalorder %s14, 0
      %p144 = por %p142, %p143
      %p145 = scmp.ne.s32.totalorder %s134, %s137
      %p146 = scmp.eq.s32.totalorder %s19, 1
      %p147 = por %p145, %p146
      %p148 = scmp.ne.s32.totalorder %s137, %s138
      %p149 = scmp.eq.s32.totalorder %s19, 0
      %p150 = por %p148, %p149
      %p151 = scmp.ne.s32.totalorder %s137, %s138
      %p152 = scmp.eq.s32.totalorder %s20, 1
      %p153 = por %p151, %p152
      %p155 = scmp.ne.s32.totalorder %s138, %s154
      %p156 = scmp.eq.s32.totalorder %s20, 0
      %p157 = por %p155, %p156
      %p158 = scmp.le.s32.totalorder 1, %s14
      %p159 = scmp.lt.s32.totalorder %s14, 3
      %p160 = pnand %p158, %p159
      %p161 = pneg %p160
      // Predicated region
      $region9: #{_lambda_.1} parent=5 // pred_check
        _
      $region10: #{_lambda_.1} parent=5 // pred_check_branch
        %163 = sbr.rel (%p160) target = $region12
      $region11: #{_lambda_.1} parent=5 // pred_region
        %s164 = ssub.s32 %s14, 1
        // Predicated region
        $region13: #{_lambda_.1} parent=11 // pred_check
          %p165 = pneg %p61
        $region14: #{_lambda_.1} parent=11 // pred_check_branch
          %167 = sbr.rel (%p165) target = $region16
        $region15: #{_lambda_.1} parent=11 // pred_region
          _
        $region16: #{_lambda_.1} parent=11 // pred_fallthru
          _
        // Predicated region
        $region17: #{_lambda_.1} parent=11 // pred_check
          %p168 = pneg %p82
        $region18: #{_lambda_.1} parent=11 // pred_check_branch
          %170 = sbr.rel (%p168) target = $region20
        $region19: #{_lambda_.1} parent=11 // pred_region
          _
        $region20: #{_lambda_.1} parent=11 // pred_fallthru
          _
        // Predicated region
        $region21: #{_lambda_.1} parent=11 // pred_check
          %p171 = pneg %p103
        $region22: #{_lambda_.1} parent=11 // pred_check_branch
          %173 = sbr.rel (%p171) target = $region24
        $region23: #{_lambda_.1} parent=11 // pred_region
          _
        $region24: #{_lambda_.1} parent=11 // pred_fallthru
          _
        // Predicated region
        $region25: #{_lambda_.1} parent=11 // pred_check
          %p174 = pneg %p124
        $region26: #{_lambda_.1} parent=11 // pred_check_branch
          %176 = sbr.rel (%p174) target = $region28
        $region27: #{_lambda_.1} parent=11 // pred_region
          _
        $region28: #{_lambda_.1} parent=11 // pred_fallthru
          _
      $region12: #{_lambda_.1} parent=5 // pred_fallthru
        _
      %p177 = scmp.lt.s32.totalorder %s14, 2
      // Predicated region
      $region29: #{_lambda_.1} parent=5 // pred_check
        %p178 = pneg %p177
      $region30: #{_lambda_.1} parent=5 // pred_check_branch
        %180 = sbr.rel (%p178) target = $region32
      $region31: #{_lambda_.1} parent=5 // pred_region
        // Predicated region
        $region33: #{_lambda_.1} parent=31 // pred_check
          %p181 = pneg %p34
        $region34: #{_lambda_.1} parent=31 // pred_check_branch
          %183 = sbr.rel (%p181) target = $region36
        $region35: #{_lambda_.1} parent=31 // pred_region
          %p184 = scmp.lt.s32.totalorder %s14, 1
          %s185 = scalar_select %p184, %s14, 1
          %s186 = smul.addr %s185, 8
          %s187 = smul.addr %s186, 4
          %s188 = scalar_lea.vmem %s0, %s187
        $region36: #{_lambda_.1} parent=31 // pred_fallthru
          _
      $region32: #{_lambda_.1} parent=5 // pred_fallthru
        _
      %p189 = scmp.le.s32.totalorder 1, %s14
      %p190 = scmp.lt.s32.totalorder %s14, 3
      %p191 = pnand %p189, %p190
      %p192 = pneg %p191
      // Predicated region
      $region37: #{_lambda_.1} parent=5 // pred_check
        _
      $region38: #{_lambda_.1} parent=5 // pred_check_branch
        %194 = sbr.rel (%p191) target = $region40
      $region39: #{_lambda_.1} parent=5 // pred_region
        %s195 = ssub.s32 %s14, 1
        %p196 = scmp.lt.s32.totalorder %s19, 1
        %s197 = scalar_select %p196, %s19, 1
        %s198 = smul.addr %s197, 8
        %s199 = smul.addr %s198, 4
        %s200 = scalar_lea.vmem %s0, %s199
        %p201 = pneg %p40
        %p202 = pneg %p37
        %p203 = pneg %p61
        %p204 = pneg %p58
        %p205 = pneg %p82
        %p206 = pneg %p79
        %p207 = pneg %p103
        %p208 = pneg %p100
        %p209 = pneg %p124
        %p210 = pneg %p121
        %p211 = pneg %p150
        %p212 = pneg %p147
        %s213 = sand.u32 %s137, 1
        %s214 = scalar_lea.sflag [#allocation3], %s213
        %s215 = sand.u32 %s137, 1
        %s216 = smul.addr %s215, 32
        %s217 = scalar_lea.vmem [#allocation2], %s216
        %p218 = scmp.lt.s32.totalorder %s19, 1
        %s219 = scalar_select %p218, %s19, 1
        %s220 = smul.addr %s219, 8
        %s221 = smul.addr %s220, 4
        %s222 = scalar_lea.vmem %s0, %s221
        %v224 = vld [vmem:[%s4] sm:$0x1]
        %v225 = vld [vmem:[%s4 + $0x1] sm:$0x1]
        %v226 = vld [vmem:[%s4 + $0x2] sm:$0x1]
        %v227 = vld [vmem:[%s4 + $0x3] sm:$0x1]
        %v228 = vld [vmem:[%s4 + $0x4] sm:$0x1]
        %v229 = vld [vmem:[%s4 + $0x5] sm:$0x1]
        %v230 = vld [vmem:[%s222] sm:$0xf]
        %v231 = vld [vmem:[%s222 + $0x4] sm:$0xf]
        %v232 = vld [vmem:[%s222 + $0x8] sm:$0xf]
        %v233 = vld [vmem:[%s222 + $0xc] sm:$0xf]
        %v234 = vld [vmem:[%s222 + $0x10] sm:$0xf]
        %v235 = vld [vmem:[%s222 + $0x14] sm:$0xf]
        %v236 = vld [vmem:[%s222 + $0x18] sm:$0xf]
        %v237 = vld [vmem:[%s222 + $0x1c] sm:$0xf]
        %v238 = vld [vmem:[%s1] sm:$0xf]
        %v239 = vld [vmem:[%s1 + $0x4] sm:$0xf]
        %v240 = vld [vmem:[%s1 + $0x8] sm:$0xf]
        %v241 = vld [vmem:[%s1 + $0xc] sm:$0xf]
        %v242 = vld [vmem:[%s1 + $0x10] sm:$0xf]
        %v243 = vld [vmem:[%s1 + $0x14] sm:$0xf]
        %v244 = vld [vmem:[%s1 + $0x18] sm:$0xf]
        %v245 = vld [vmem:[%s1 + $0x1c] sm:$0xf]
        %v246 = vld [vmem:[%s1 + $0x20] sm:$0xf]
        %v247 = vld [vmem:[%s1 + $0x24] sm:$0xf]
        %v248 = vld [vmem:[%s1 + $0x28] sm:$0xf]
        %v249 = vld [vmem:[%s1 + $0x2c] sm:$0xf]
        %v250 = vld [vmem:[%s1 + $0x30] sm:$0xf]
        %v251 = vld [vmem:[%s1 + $0x34] sm:$0xf]
        %v252 = vld [vmem:[%s1 + $0x38] sm:$0xf]
        %v253 = vld [vmem:[%s1 + $0x3c] sm:$0xf]
        %v262 = vunpack.c.l.b16 %v230
        %v263 = vunpack.c.l.b16 %v231
        %v264 = vunpack.c.l.b16 %v232
        %v265 = vunpack.c.l.b16 %v233
        %v266 = vunpack.c.l.b16 %v234
        %v267 = vunpack.c.l.b16 %v235
        %v268 = vunpack.c.l.b16 %v236
        %v269 = vunpack.c.l.b16 %v237
        %v270 = vpack.c.b16 %v263, %v262
        %v271 = vpack.c.b16 %v265, %v264
        %v272 = vpack.c.b16 %v267, %v266
        %v273 = vpack.c.b16 %v269, %v268
        %v294 = vunpack.c.l.b16 %v238
        %v295 = vunpack.c.l.b16 %v239
        %v296 = vunpack.c.l.b16 %v240
        %v297 = vunpack.c.l.b16 %v241
        %v298 = vunpack.c.l.b16 %v242
        %v299 = vunpack.c.l.b16 %v243
        %v300 = vunpack.c.l.b16 %v244
        %v301 = vunpack.c.l.b16 %v245
        %v302 = vunpack.c.l.b16 %v246
        %v303 = vunpack.c.l.b16 %v247
        %v304 = vunpack.c.l.b16 %v248
        %v305 = vunpack.c.l.b16 %v249
        %v306 = vunpack.c.l.b16 %v250
        %v307 = vunpack.c.l.b16 %v251
        %v308 = vunpack.c.l.b16 %v252
        %v309 = vunpack.c.l.b16 %v253
        %v310 = vpack.c.b16 %v295, %v294
        %v311 = vpack.c.b16 %v297, %v296
        %v312 = vpack.c.b16 %v299, %v298
        %v313 = vpack.c.b16 %v301, %v300
        %v314 = vpack.c.b16 %v303, %v302
        %v315 = vpack.c.b16 %v305, %v304
        %v316 = vpack.c.b16 %v307, %v306
        %v317 = vpack.c.b16 %v309, %v308
        %326 = vmatpush.bf16.msra.mxu0 %v317
        %327 = vmatpush.bf16.msra.mxu0 %v316
        %328 = vmatpush.bf16.msra.mxu0 %v315
        %329 = vmatpush.bf16.msra.mxu0 %v314
        %330 = vmatpush.bf16.msra.mxu0 %v313
        %331 = vmatpush.bf16.msra.mxu0 %v312
        %332 = vmatpush.bf16.msra.mxu0 %v311
        %333 = vmatpush.bf16.msra.mxu0 %v310
        %334 = vmatmul.bf16.gmra.mxu0 %v270
        %v335 = vpop.f32.mrf.mxu0
        %v336 = vadd.f32 0.0, %v335
        %v337 = vpop.f32.mrf.mxu0
        %v338 = vadd.f32 0.0, %v337
        %339 = vmatmul.bf16.gmra.mxu0 %v271
        %v340 = vpop.f32.mrf.mxu0
        %v341 = vadd.f32 0.0, %v340
        %v342 = vpop.f32.mrf.mxu0
        %v343 = vadd.f32 0.0, %v342
        %344 = vmatmul.bf16.gmra.mxu0 %v272
        %v345 = vpop.f32.mrf.mxu0
        %v346 = vadd.f32 0.0, %v345
        %v347 = vpop.f32.mrf.mxu0
        %v348 = vadd.f32 0.0, %v347
        %349 = vmatmul.bf16.gmra.mxu0 %v273
        %v350 = vpop.f32.mrf.mxu0
        %v351 = vadd.f32 0.0, %v350
        %v352 = vpop.f32.mrf.mxu0
        %v353 = vadd.f32 0.0, %v352
        %354 = vdwg.mxu0
        %v355 = vperm.slane %v224, 0
        %v356 = vmul.f32 %v336, %v355
        %v357 = vmul.f32 %v338, %v355
        %v358 = vmul.f32 %v341, %v355
        %v359 = vmul.f32 %v343, %v355
        %v360 = vmul.f32 %v346, %v355
        %v361 = vmul.f32 %v348, %v355
        %v362 = vmul.f32 %v351, %v355
        %v363 = vmul.f32 %v353, %v355
        %v364 = vperm.slane %v225, 0
        %v365 = vadd.f32 %v356, %v364
        %v366 = vadd.f32 %v357, %v364
        %v367 = vadd.f32 %v358, %v364
        %v368 = vadd.f32 %v359, %v364
        %v369 = vadd.f32 %v360, %v364
        %v370 = vadd.f32 %v361, %v364
        %v371 = vadd.f32 %v362, %v364
        %v372 = vadd.f32 %v363, %v364
        %v373 = vmax.f32 %v365, 0.0
        %v374 = vmax.f32 %v366, 0.0
        %v375 = vmax.f32 %v367, 0.0
        %v376 = vmax.f32 %v368, 0.0
        %v377 = vmax.f32 %v369, 0.0
        %v378 = vmax.f32 %v370, 0.0
        %v379 = vmax.f32 %v371, 0.0
        %v380 = vmax.f32 %v372, 0.0
        %v381 = vpack.c.bf16 %v373, %v373
        %v382 = vpack.c.bf16 %v374, %v374
        %v383 = vpack.c.bf16 %v375, %v375
        %v384 = vpack.c.bf16 %v376, %v376
        %v385 = vpack.c.bf16 %v377, %v377
        %v386 = vpack.c.bf16 %v378, %v378
        %v387 = vpack.c.bf16 %v379, %v379
        %v388 = vpack.c.bf16 %v380, %v380
        %v397 = vunpack.c.l.b16 %v381
        %v398 = vunpack.c.l.b16 %v382
        %v399 = vunpack.c.l.b16 %v383
        %v400 = vunpack.c.l.b16 %v384
        %v401 = vunpack.c.l.b16 %v385
        %v402 = vunpack.c.l.b16 %v386
        %v403 = vunpack.c.l.b16 %v387
        %v404 = vunpack.c.l.b16 %v388
        %v405 = vpack.c.b16 %v397, %v397
        %v406 = vpack.c.b16 %v398, %v398
        %v407 = vpack.c.b16 %v399, %v399
        %v408 = vpack.c.b16 %v400, %v400
        %v409 = vpack.c.b16 %v401, %v401
        %v410 = vpack.c.b16 %v402, %v402
        %v411 = vpack.c.b16 %v403, %v403
        %v412 = vpack.c.b16 %v404, %v404
        %v414 = vshrl.u32 %v405, 16
        %v416 = vrot.slane %v414, 7
        %v417 = vshll.u32 %v405, 16
        %v419 = vor.u32 %v416, %v417
        %v421 = vshrl.u32 %v406, 16
        %v423 = vrot.slane %v421, 7
        %v424 = vshll.u32 %v406, 16
        %v426 = vor.u32 %v423, %v424
        %v428 = vshrl.u32 %v407, 16
        %v430 = vrot.slane %v428, 7
        %v431 = vshll.u32 %v407, 16
        %v433 = vor.u32 %v430, %v431
        %v435 = vshrl.u32 %v408, 16
        %v437 = vrot.slane %v435, 7
        %v438 = vshll.u32 %v408, 16
        %v440 = vor.u32 %v437, %v438
        %v442 = vshrl.u32 %v409, 16
        %v444 = vrot.slane %v442, 7
        %v445 = vshll.u32 %v409, 16
        %v447 = vor.u32 %v444, %v445
        %v449 = vshrl.u32 %v410, 16
        %v451 = vrot.slane %v449, 7
        %v452 = vshll.u32 %v410, 16
        %v454 = vor.u32 %v451, %v452
        %v456 = vshrl.u32 %v411, 16
        %v458 = vrot.slane %v456, 7
        %v459 = vshll.u32 %v411, 16
        %v461 = vor.u32 %v458, %v459
        %v463 = vshrl.u32 %v412, 16
        %v465 = vrot.slane %v463, 7
        %v466 = vshll.u32 %v412, 16
        %v468 = vor.u32 %v465, %v466
        %vm477 = vcmask 1040384
        %vm478 = vsmask.f32 256
        %vm479 = vmand %vm477, %vm478
        %v480 = vsel %vm479, 0, %v419
        %v481 = vsel %vm479, 0, %v426
        %v482 = vsel %vm479, 0, %v433
        %v483 = vsel %vm479, 0, %v440
        %v484 = vsel %vm479, 0, %v447
        %v485 = vsel %vm479, 0, %v454
        %v486 = vsel %vm479, 0, %v461
        %v487 = vsel %vm479, 0, %v468
        %vm488 = vcmask 1044480
        %vm489 = vsmask.f32 4352
        %vm490 = vmand %vm488, %vm489
        %v491 = vsel %vm490, %v480, 0
        %v492 = vsel %vm490, %v481, 0
        %v493 = vsel %vm490, %v482, 0
        %v494 = vsel %vm490, %v483, 0
        %v495 = vsel %vm490, %v484, 0
        %v496 = vsel %vm490, %v485, 0
        %v497 = vsel %vm490, %v486, 0
        %v498 = vsel %vm490, %v487, 0
        %v507 = vunpack.c.l.b16 0
        %v508 = vunpack.c.h.b16 0
        %v509 = vunpack.c.l.b16 %v491
        %v510 = vunpack.c.h.b16 %v491
        %v511 = vunpack.c.l.b16 %v492
        %v512 = vunpack.c.h.b16 %v492
        %v513 = vunpack.c.l.b16 %v493
        %v514 = vunpack.c.h.b16 %v493
        %v515 = vunpack.c.l.b16 %v494
        %v516 = vunpack.c.h.b16 %v494
        %v517 = vunpack.c.l.b16 %v495
        %v518 = vunpack.c.h.b16 %v495
        %v519 = vunpack.c.l.b16 %v496
        %v520 = vunpack.c.h.b16 %v496
        %v521 = vunpack.c.l.b16 %v497
        %v522 = vunpack.c.h.b16 %v497
        %v523 = vpack.c.b16 %v507, %v507
        %v524 = vpack.c.b16 %v508, %v508
        %v525 = vpack.c.b16 %v509, %v509
        %v526 = vpack.c.b16 %v510, %v510
        %v527 = vpack.c.b16 %v511, %v511
        %v528 = vpack.c.b16 %v512, %v512
        %v529 = vpack.c.b16 %v513, %v513
        %v530 = vpack.c.b16 %v514, %v514
        %v531 = vpack.c.b16 %v515, %v515
        %v532 = vpack.c.b16 %v516, %v516
        %v533 = vpack.c.b16 %v517, %v517
        %v534 = vpack.c.b16 %v518, %v518
        %v535 = vpack.c.b16 %v519, %v519
        %v536 = vpack.c.b16 %v520, %v520
        %v537 = vpack.c.b16 %v521, %v521
        %v538 = vpack.c.b16 %v522, %v522
        %vm539 = vsmask.f32 3328
        %vm540 = vsmask.f32 7440
        %vm541 = vmor %vm539, %vm540
        %v543 = vshrl.u32 %v523, 16
        %v545 = vrot.slane %v543, 4
        %v546 = vshll.u32 %v523, 16
        %v548 = vrot.slane %v546, 5
        %v549 = vor.u32 %v545, %v548
        %v550 = vrot.slane %v549, 4
        %v552 = vshll.u32 %v524, 16
        %v554 = vrot.slane %v552, 5
        %v555 = vsel %vm541, %v550, %v554
        %v557 = vshrl.u32 %v525, 16
        %v559 = vrot.slane %v557, 4
        %v560 = vshll.u32 %v525, 16
        %v562 = vrot.slane %v560, 5
        %v563 = vor.u32 %v559, %v562
        %v564 = vrot.slane %v563, 4
        %v566 = vshll.u32 %v526, 16
        %v568 = vrot.slane %v566, 5
        %v569 = vsel %vm541, %v564, %v568
        %v571 = vshrl.u32 %v527, 16
        %v573 = vrot.slane %v571, 4
        %v574 = vshll.u32 %v527, 16
        %v576 = vrot.slane %v574, 5
        %v577 = vor.u32 %v573, %v576
        %v578 = vrot.slane %v577, 4
        %v580 = vshll.u32 %v528, 16
        %v582 = vrot.slane %v580, 5
        %v583 = vsel %vm541, %v578, %v582
        %v585 = vshrl.u32 %v529, 16
        %v587 = vrot.slane %v585, 4
        %v588 = vshll.u32 %v529, 16
        %v590 = vrot.slane %v588, 5
        %v591 = vor.u32 %v587, %v590
        %v592 = vrot.slane %v591, 4
        %v594 = vshll.u32 %v530, 16
        %v596 = vrot.slane %v594, 5
        %v597 = vsel %vm541, %v592, %v596
        %v599 = vshrl.u32 %v531, 16
        %v601 = vrot.slane %v599, 4
        %v602 = vshll.u32 %v531, 16
        %v604 = vrot.slane %v602, 5
        %v605 = vor.u32 %v601, %v604
        %v606 = vrot.slane %v605, 4
        %v608 = vshll.u32 %v532, 16
        %v610 = vrot.slane %v608, 5
        %v611 = vsel %vm541, %v606, %v610
        %v613 = vshrl.u32 %v533, 16
        %v615 = vrot.slane %v613, 4
        %v616 = vshll.u32 %v533, 16
        %v618 = vrot.slane %v616, 5
        %v619 = vor.u32 %v615, %v618
        %v620 = vrot.slane %v619, 4
        %v622 = vshll.u32 %v534, 16
        %v624 = vrot.slane %v622, 5
        %v625 = vsel %vm541, %v620, %v624
        %v627 = vshrl.u32 %v535, 16
        %v629 = vrot.slane %v627, 4
        %v630 = vshll.u32 %v535, 16
        %v632 = vrot.slane %v630, 5
        %v633 = vor.u32 %v629, %v632
        %v634 = vrot.slane %v633, 4
        %v636 = vshll.u32 %v536, 16
        %v638 = vrot.slane %v636, 5
        %v639 = vsel %vm541, %v634, %v638
        %v641 = vshrl.u32 %v537, 16
        %v643 = vrot.slane %v641, 4
        %v644 = vshll.u32 %v537, 16
        %v646 = vrot.slane %v644, 5
        %v647 = vor.u32 %v643, %v646
        %v648 = vrot.slane %v647, 4
        %v650 = vshll.u32 %v538, 16
        %v652 = vrot.slane %v650, 5
        %v653 = vsel %vm541, %v648, %v652
        %vm654 = vcmask 1042432
        %vm655 = vcmask 1046532
        %vm656 = vmor %vm654, %vm655
        %v657 = vrot.slane %v523, 5
        %v658 = vrot.slane %v657, 4
        %v659 = vrot.slane %v524, 5
        %v660 = vsel %vm656, %v658, %v659
        %v661 = vrot.slane %v525, 5
        %v662 = vrot.slane %v661, 4
        %v663 = vrot.slane %v526, 5
        %v664 = vsel %vm656, %v662, %v663
        %v665 = vrot.slane %v527, 5
        %v666 = vrot.slane %v665, 4
        %v667 = vrot.slane %v528, 5
        %v668 = vsel %vm656, %v666, %v667
        %v669 = vrot.slane %v529, 5
        %v670 = vrot.slane %v669, 4
        %v671 = vrot.slane %v530, 5
        %v672 = vsel %vm656, %v670, %v671
        %v673 = vrot.slane %v531, 5
        %v674 = vrot.slane %v673, 4
        %v675 = vrot.slane %v532, 5
        %v676 = vsel %vm656, %v674, %v675
        %v677 = vrot.slane %v533, 5
        %v678 = vrot.slane %v677, 4
        %v679 = vrot.slane %v534, 5
        %v680 = vsel %vm656, %v678, %v679
        %v681 = vrot.slane %v535, 5
        %v682 = vrot.slane %v681, 4
        %v683 = vrot.slane %v536, 5
        %v684 = vsel %vm656, %v682, %v683
        %v685 = vrot.slane %v537, 5
        %v686 = vrot.slane %v685, 4
        %v687 = vrot.slane %v538, 5
        %v688 = vsel %vm656, %v686, %v687
        %v689 = vpack.c.b16 %v509, %v507
        %v690 = vpack.c.b16 %v513, %v511
        %v691 = vpack.c.b16 %v517, %v515
        %v692 = vpack.c.b16 %v521, %v519
        %v693 = vunpack.c.l.b16 %v555
        %v694 = vunpack.c.l.b16 %v569
        %v695 = vunpack.c.l.b16 %v583
        %v696 = vunpack.c.l.b16 %v597
        %v697 = vunpack.c.l.b16 %v611
        %v698 = vunpack.c.l.b16 %v625
        %v699 = vunpack.c.l.b16 %v639
        %v700 = vunpack.c.l.b16 %v653
        %v701 = vpack.c.b16 %v694, %v693
        %v702 = vpack.c.b16 %v696, %v695
        %v703 = vpack.c.b16 %v698, %v697
        %v704 = vpack.c.b16 %v700, %v699
        %705 = vrot.lane.b32.xlu0 %v701, 32
        %v706 = vpop.permute.xlu0 %705
        %707 = vrot.lane.b32.xlu0 %v702, 32
        %v708 = vpop.permute.xlu0 %707
        %709 = vrot.lane.b32.xlu0 %v703, 32
        %v710 = vpop.permute.xlu0 %709
        %711 = vrot.lane.b32.xlu0 %v704, 32
        %v712 = vpop.permute.xlu0 %711
        %v713 = vunpack.c.l.b16 %v660
        %v714 = vunpack.c.l.b16 %v664
        %v715 = vunpack.c.l.b16 %v668
        %v716 = vunpack.c.l.b16 %v672
        %v717 = vunpack.c.l.b16 %v676
        %v718 = vunpack.c.l.b16 %v680
        %v719 = vunpack.c.l.b16 %v684
        %v720 = vunpack.c.l.b16 %v688
        %v721 = vpack.c.b16 %v714, %v713
        %v722 = vpack.c.b16 %v716, %v715
        %v723 = vpack.c.b16 %v718, %v717
        %v724 = vpack.c.b16 %v720, %v719
        %725 = vrot.lane.b32.xlu0 %v721, 64
        %v726 = vpop.permute.xlu0 %725
        %727 = vrot.lane.b32.xlu0 %v722, 64
        %v728 = vpop.permute.xlu0 %727
        %729 = vrot.lane.b32.xlu0 %v723, 64
        %v730 = vpop.permute.xlu0 %729
        %731 = vrot.lane.b32.xlu0 %v724, 64
        %v732 = vpop.permute.xlu0 %731
        %vm733 = vcmask 261120
        %v736 = vsel %vm733, %v689, %v706
        %v739 = vsel %vm733, %v690, %v708
        %v742 = vsel %vm733, %v691, %v710
        %v745 = vsel %vm733, %v692, %v712
        %vm746 = vcmask 523264
        %v748 = vsel %vm746, %v736, %v726
        %v750 = vsel %vm746, %v739, %v728
        %v752 = vsel %vm746, %v742, %v730
        %v754 = vsel %vm746, %v745, %v732
        %v755 = vld [vmem:[%s2] sm:$0xf]
        %v756 = vld [vmem:[%s2 + $0x4] sm:$0xf]
        %v757 = vld [vmem:[%s2 + $0x8] sm:$0xf]
        %v758 = vld [vmem:[%s2 + $0xc] sm:$0xf]
        %v759 = vld [vmem:[%s2 + $0x10] sm:$0xf]
        %v760 = vld [vmem:[%s2 + $0x14] sm:$0xf]
        %v761 = vld [vmem:[%s2 + $0x18] sm:$0xf]
        %v762 = vld [vmem:[%s2 + $0x1c] sm:$0xf]
        %v763 = vld [vmem:[%s2 + $0x20] sm:$0xf]
        %v764 = vld [vmem:[%s2 + $0x24] sm:$0xf]
        %v765 = vld [vmem:[%s2 + $0x28] sm:$0xf]
        %v766 = vld [vmem:[%s2 + $0x2c] sm:$0xf]
        %v768 = vunpack.c.l.b16 %v498
        %v769 = vunpack.c.h.b16 %v498
        %v770 = vpack.c.b16 %v768, %v768
        %v771 = vpack.c.b16 %v769, %v769
        %v773 = vshrl.u32 %v770, 16
        %v775 = vrot.slane %v773, 4
        %v776 = vshll.u32 %v770, 16
        %v778 = vrot.slane %v776, 5
        %v779 = vor.u32 %v775, %v778
        %v780 = vrot.slane %v779, 4
        %v782 = vshll.u32 %v771, 16
        %v784 = vrot.slane %v782, 5
        %v785 = vsel %vm541, %v780, %v784
        %v786 = vrot.slane %v770, 5
        %v787 = vrot.slane %v786, 4
        %v788 = vrot.slane %v771, 5
        %v789 = vsel %vm656, %v787, %v788
        %v790 = vpack.c.b16 %v511, %v509
        %v791 = vpack.c.b16 %v515, %v513
        %v792 = vpack.c.b16 %v519, %v517
        %v793 = vpack.c.b16 %v768, %v521
        %v794 = vunpack.c.l.b16 %v785
        %v795 = vpack.c.b16 %v695, %v694
        %v796 = vpack.c.b16 %v697, %v696
        %v797 = vpack.c.b16 %v699, %v698
        %v798 = vpack.c.b16 %v794, %v700
        %799 = vrot.lane.b32.xlu0 %v795, 32
        %v800 = vpop.permute.xlu0 %799
        %801 = vrot.lane.b32.xlu0 %v796, 32
        %v802 = vpop.permute.xlu0 %801
        %803 = vrot.lane.b32.xlu0 %v797, 32
        %v804 = vpop.permute.xlu0 %803
        %805 = vrot.lane.b32.xlu0 %v798, 32
        %v806 = vpop.permute.xlu0 %805
        %v807 = vunpack.c.l.b16 %v789
        %v808 = vpack.c.b16 %v715, %v714
        %v809 = vpack.c.b16 %v717, %v716
        %v810 = vpack.c.b16 %v719, %v718
        %v811 = vpack.c.b16 %v807, %v720
        %812 = vrot.lane.b32.xlu0 %v808, 64
        %v813 = vpop.permute.xlu0 %812
        %814 = vrot.lane.b32.xlu0 %v809, 64
        %v815 = vpop.permute.xlu0 %814
        %816 = vrot.lane.b32.xlu0 %v810, 64
        %v817 = vpop.permute.xlu0 %816
        %818 = vrot.lane.b32.xlu0 %v811, 64
        %v819 = vpop.permute.xlu0 %818
        %v822 = vsel %vm733, %v790, %v800
        %v825 = vsel %vm733, %v791, %v802
        %v828 = vsel %vm733, %v792, %v804
        %v831 = vsel %vm733, %v793, %v806
        %v833 = vsel %vm746, %v822, %v813
        %v835 = vsel %vm746, %v825, %v815
        %v837 = vsel %vm746, %v828, %v817
        %v839 = vsel %vm746, %v831, %v819
        %s840 = scalar_lea.vmem %s2, 48
        %v841 = vld [vmem:[%s840] sm:$0xf]
        %v842 = vld [vmem:[%s840 + $0x4] sm:$0xf]
        %v843 = vld [vmem:[%s840 + $0x8] sm:$0xf]
        %v844 = vld [vmem:[%s840 + $0xc] sm:$0xf]
        %v845 = vld [vmem:[%s840 + $0x10] sm:$0xf]
        %v846 = vld [vmem:[%s840 + $0x14] sm:$0xf]
        %v847 = vld [vmem:[%s840 + $0x18] sm:$0xf]
        %v848 = vld [vmem:[%s840 + $0x1c] sm:$0xf]
        %v849 = vld [vmem:[%s840 + $0x20] sm:$0xf]
        %v850 = vld [vmem:[%s840 + $0x24] sm:$0xf]
        %v851 = vld [vmem:[%s840 + $0x28] sm:$0xf]
        %v852 = vld [vmem:[%s840 + $0x2c] sm:$0xf]
        %v865 = vunpack.c.l.b16 %v841
        %v866 = vunpack.c.l.b16 %v842
        %v867 = vunpack.c.l.b16 %v843
        %v868 = vunpack.c.l.b16 %v844
        %v869 = vunpack.c.l.b16 %v845
        %v870 = vunpack.c.l.b16 %v846
        %v871 = vunpack.c.l.b16 %v847
        %v872 = vunpack.c.l.b16 %v848
        %v873 = vunpack.c.l.b16 %v849
        %v874 = vunpack.c.l.b16 %v850
        %v875 = vunpack.c.l.b16 %v851
        %v876 = vunpack.c.l.b16 %v852
        %v877 = vpack.c.b16 %v866, %v865
        %v878 = vpack.c.b16 %v868, %v867
        %v879 = vpack.c.b16 %v870, %v869
        %v880 = vpack.c.b16 %v872, %v871
        %v881 = vpack.c.b16 %v874, %v873
        %v882 = vpack.c.b16 %v876, %v875
        %vm889 = vcmask 785408
        %v890 = vsel %vm889, %v833, 0
        %v892 = vsel %vm889, %v835, 0
        %v894 = vsel %vm889, %v837, 0
        %v896 = vsel %vm889, %v839, 0
        %898 = vmatpush.bf16.msra.mxu0 0
        %899 = vmatpush.bf16.msra.mxu0 0
        %900 = vmatpush.bf16.msra.mxu0 %v882
        %901 = vmatpush.bf16.msra.mxu0 %v881
        %902 = vmatpush.bf16.msra.mxu0 %v880
        %903 = vmatpush.bf16.msra.mxu0 %v879
        %904 = vmatpush.bf16.msra.mxu0 %v878
        %905 = vmatpush.bf16.msra.mxu0 %v877
        %906 = vmatmul.bf16.gmra.mxu0 %v890
        %v907 = vpop.f32.mrf.mxu0
        %v908 = vadd.f32 0.0, %v907
        %v909 = vpop.f32.mrf.mxu0
        %v910 = vadd.f32 0.0, %v909
        %911 = vmatmul.bf16.gmra.mxu0 %v892
        %v912 = vpop.f32.mrf.mxu0
        %v913 = vadd.f32 0.0, %v912
        %v914 = vpop.f32.mrf.mxu0
        %v915 = vadd.f32 0.0, %v914
        %916 = vmatmul.bf16.gmra.mxu0 %v894
        %v917 = vpop.f32.mrf.mxu0
        %v918 = vadd.f32 0.0, %v917
        %v919 = vpop.f32.mrf.mxu0
        %v920 = vadd.f32 0.0, %v919
        %921 = vmatmul.bf16.gmra.mxu0 %v896
        %v922 = vpop.f32.mrf.mxu0
        %v923 = vadd.f32 0.0, %v922
        %v924 = vpop.f32.mrf.mxu0
        %v925 = vadd.f32 0.0, %v924
        %926 = vdwg.mxu0
        %v939 = vunpack.c.l.b16 %v755
        %v940 = vunpack.c.l.b16 %v756
        %v941 = vunpack.c.l.b16 %v757
        %v942 = vunpack.c.l.b16 %v758
        %v943 = vunpack.c.l.b16 %v759
        %v944 = vunpack.c.l.b16 %v760
        %v945 = vunpack.c.l.b16 %v761
        %v946 = vunpack.c.l.b16 %v762
        %v947 = vunpack.c.l.b16 %v763
        %v948 = vunpack.c.l.b16 %v764
        %v949 = vunpack.c.l.b16 %v765
        %v950 = vunpack.c.l.b16 %v766
        %v951 = vpack.c.b16 %v940, %v939
        %v952 = vpack.c.b16 %v942, %v941
        %v953 = vpack.c.b16 %v944, %v943
        %v954 = vpack.c.b16 %v946, %v945
        %v955 = vpack.c.b16 %v948, %v947
        %v956 = vpack.c.b16 %v950, %v949
        %v963 = vsel %vm889, %v748, 0
        %v965 = vsel %vm889, %v750, 0
        %v967 = vsel %vm889, %v752, 0
        %v969 = vsel %vm889, %v754, 0
        %971 = vmatpush.bf16.msra.mxu0 0
        %972 = vmatpush.bf16.msra.mxu0 0
        %973 = vmatpush.bf16.msra.mxu0 %v956
        %974 = vmatpush.bf16.msra.mxu0 %v955
        %975 = vmatpush.bf16.msra.mxu0 %v954
        %976 = vmatpush.bf16.msra.mxu0 %v953
        %977 = vmatpush.bf16.msra.mxu0 %v952
        %978 = vmatpush.bf16.msra.mxu0 %v951
        %979 = vmatmul.bf16.gmra.mxu0 %v963
        %v980 = vpop.f32.mrf.mxu0
        %v981 = vadd.f32 %v908, %v980
        %v982 = vpop.f32.mrf.mxu0
        %v983 = vadd.f32 %v910, %v982
        %984 = vmatmul.bf16.gmra.mxu0 %v965
        %v985 = vpop.f32.mrf.mxu0
        %v986 = vadd.f32 %v913, %v985
        %v987 = vpop.f32.mrf.mxu0
        %v988 = vadd.f32 %v915, %v987
        %989 = vmatmul.bf16.gmra.mxu0 %v967
        %v990 = vpop.f32.mrf.mxu0
        %v991 = vadd.f32 %v918, %v990
        %v992 = vpop.f32.mrf.mxu0
        %v993 = vadd.f32 %v920, %v992
        %994 = vmatmul.bf16.gmra.mxu0 %v969
        %v995 = vpop.f32.mrf.mxu0
        %v996 = vadd.f32 %v923, %v995
        %v997 = vpop.f32.mrf.mxu0
        %v998 = vadd.f32 %v925, %v997
        %999 = vdwg.mxu0
        %v1000 = vpack.c.b16 %v507, %v768
        %v1001 = vpack.c.b16 %v693, %v794
        %1002 = vrot.lane.b32.xlu0 %v1001, 32
        %v1003 = vpop.permute.xlu0 %1002
        %v1004 = vpack.c.b16 %v713, %v807
        %1005 = vrot.lane.b32.xlu0 %v1004, 64
        %v1006 = vpop.permute.xlu0 %1005
        %v1009 = vsel %vm733, %v1000, %v1003
        %v1011 = vsel %vm746, %v1009, %v1006
        %s1012 = scalar_lea.vmem %s2, 96
        %v1013 = vld [vmem:[%s1012] sm:$0xf]
        %v1014 = vld [vmem:[%s1012 + $0x4] sm:$0xf]
        %v1015 = vld [vmem:[%s1012 + $0x8] sm:$0xf]
        %v1016 = vld [vmem:[%s1012 + $0xc] sm:$0xf]
        %v1017 = vld [vmem:[%s1012 + $0x10] sm:$0xf]
        %v1018 = vld [vmem:[%s1012 + $0x14] sm:$0xf]
        %v1019 = vld [vmem:[%s1012 + $0x18] sm:$0xf]
        %v1020 = vld [vmem:[%s1012 + $0x1c] sm:$0xf]
        %v1021 = vld [vmem:[%s1012 + $0x20] sm:$0xf]
        %v1022 = vld [vmem:[%s1012 + $0x24] sm:$0xf]
        %v1023 = vld [vmem:[%s1012 + $0x28] sm:$0xf]
        %v1024 = vld [vmem:[%s1012 + $0x2c] sm:$0xf]
        %v1037 = vunpack.c.l.b16 %v1013
        %v1038 = vunpack.c.l.b16 %v1014
        %v1039 = vunpack.c.l.b16 %v1015
        %v1040 = vunpack.c.l.b16 %v1016
        %v1041 = vunpack.c.l.b16 %v1017
        %v1042 = vunpack.c.l.b16 %v1018
        %v1043 = vunpack.c.l.b16 %v1019
        %v1044 = vunpack.c.l.b16 %v1020
        %v1045 = vunpack.c.l.b16 %v1021
        %v1046 = vunpack.c.l.b16 %v1022
        %v1047 = vunpack.c.l.b16 %v1023
        %v1048 = vunpack.c.l.b16 %v1024
        %v1049 = vpack.c.b16 %v1038, %v1037
        %v1050 = vpack.c.b16 %v1040, %v1039
        %v1051 = vpack.c.b16 %v1042, %v1041
        %v1052 = vpack.c.b16 %v1044, %v1043
        %v1053 = vpack.c.b16 %v1046, %v1045
        %v1054 = vpack.c.b16 %v1048, %v1047
        %v1061 = vsel %vm889, %v1011, 0
        %1063 = vmatpush.bf16.msra.mxu0 0
        %1064 = vmatpush.bf16.msra.mxu0 0
        %1065 = vmatpush.bf16.msra.mxu0 %v1054
        %1066 = vmatpush.bf16.msra.mxu0 %v1053
        %1067 = vmatpush.bf16.msra.mxu0 %v1052
        %1068 = vmatpush.bf16.msra.mxu0 %v1051
        %1069 = vmatpush.bf16.msra.mxu0 %v1050
        %1070 = vmatpush.bf16.msra.mxu0 %v1049
        %1071 = vmatmul.bf16.gmra.mxu0 %v965
        %v1072 = vpop.f32.mrf.mxu0
        %v1073 = vadd.f32 0.0, %v1072
        %v1074 = vpop.f32.mrf.mxu0
        %v1075 = vadd.f32 0.0, %v1074
        %1076 = vmatmul.bf16.gmra.mxu0 %v967
        %v1077 = vpop.f32.mrf.mxu0
        %v1078 = vadd.f32 0.0, %v1077
        %v1079 = vpop.f32.mrf.mxu0
        %v1080 = vadd.f32 0.0, %v1079
        %1081 = vmatmul.bf16.gmra.mxu0 %v969
        %v1082 = vpop.f32.mrf.mxu0
        %v1083 = vadd.f32 0.0, %v1082
        %v1084 = vpop.f32.mrf.mxu0
        %v1085 = vadd.f32 0.0, %v1084
        %1086 = vmatmul.bf16.gmra.mxu0 %v1061
        %v1087 = vpop.f32.mrf.mxu0
        %v1088 = vadd.f32 0.0, %v1087
        %v1089 = vpop.f32.mrf.mxu0
        %v1090 = vadd.f32 0.0, %v1089
        %1091 = vdwg.mxu0
        %v1092 = vadd.f32 %v981, %v1073
        %v1093 = vadd.f32 %v983, %v1075
        %v1094 = vadd.f32 %v986, %v1078
        %v1095 = vadd.f32 %v988, %v1080
        %v1096 = vadd.f32 %v991, %v1083
        %v1097 = vadd.f32 %v993, %v1085
        %v1098 = vadd.f32 %v996, %v1088
        %v1099 = vadd.f32 %v998, %v1090
        %v1100 = vperm.slane %v226, 0
        %v1101 = vmul.f32 %v1092, %v1100
        %v1102 = vmul.f32 %v1093, %v1100
        %v1103 = vmul.f32 %v1094, %v1100
        %v1104 = vmul.f32 %v1095, %v1100
        %v1105 = vmul.f32 %v1096, %v1100
        %v1106 = vmul.f32 %v1097, %v1100
        %v1107 = vmul.f32 %v1098, %v1100
        %v1108 = vmul.f32 %v1099, %v1100
        %v1109 = vperm.slane %v227, 0
        %v1110 = vadd.f32 %v1101, %v1109
        %v1111 = vadd.f32 %v1102, %v1109
        %v1112 = vadd.f32 %v1103, %v1109
        %v1113 = vadd.f32 %v1104, %v1109
        %v1114 = vadd.f32 %v1105, %v1109
        %v1115 = vadd.f32 %v1106, %v1109
        %v1116 = vadd.f32 %v1107, %v1109
        %v1117 = vadd.f32 %v1108, %v1109
        %v1118 = vmax.f32 %v1110, 0.0
        %v1119 = vmax.f32 %v1111, 0.0
        %v1120 = vmax.f32 %v1112, 0.0
        %v1121 = vmax.f32 %v1113, 0.0
        %v1122 = vmax.f32 %v1114, 0.0
        %v1123 = vmax.f32 %v1115, 0.0
        %v1124 = vmax.f32 %v1116, 0.0
        %v1125 = vmax.f32 %v1117, 0.0
        %v1126 = vpack.c.bf16 %v1119, %v1118
        %v1127 = vpack.c.bf16 %v1121, %v1120
        %v1128 = vpack.c.bf16 %v1123, %v1122
        %v1129 = vpack.c.bf16 %v1125, %v1124
        %v1130 = vld [vmem:[%s3] sm:$0xf]
        %v1131 = vld [vmem:[%s3 + $0x4] sm:$0xf]
        %v1132 = vld [vmem:[%s3 + $0x8] sm:$0xf]
        %v1133 = vld [vmem:[%s3 + $0xc] sm:$0xf]
        %v1138 = vunpack.c.l.b16 %v1130
        %v1139 = vunpack.c.l.b16 %v1131
        %v1140 = vunpack.c.l.b16 %v1132
        %v1141 = vunpack.c.l.b16 %v1133
        %v1142 = vpack.c.b16 %v1139, %v1138
        %v1143 = vpack.c.b16 %v1141, %v1140
        %v1147 = vsel %vm733, %v1126, 0
        %v1150 = vsel %vm733, %v1127, 0
        %v1153 = vsel %vm733, %v1128, 0
        %v1156 = vsel %vm733, %v1129, 0
        %1158 = vmatpush.bf16.msra.mxu0 0
        %1159 = vmatpush.bf16.msra.mxu0 0
        %1160 = vmatpush.bf16.msra.mxu0 0
        %1161 = vmatpush.bf16.msra.mxu0 0
        %1162 = vmatpush.bf16.msra.mxu0 0
        %1163 = vmatpush.bf16.msra.mxu0 0
        %1164 = vmatpush.bf16.msra.mxu0 %v1143
        %1165 = vmatpush.bf16.msra.mxu0 %v1142
        %1166 = vmatmul.bf16.gmra.mxu0 %v1147
        %v1167 = vpop.f32.mrf.mxu0
        %v1168 = vadd.f32 0.0, %v1167
        %v1169 = vpop.f32.mrf.mxu0
        %v1170 = vadd.f32 0.0, %v1169
        %1171 = vmatmul.bf16.gmra.mxu0 %v1150
        %v1172 = vpop.f32.mrf.mxu0
        %v1173 = vadd.f32 0.0, %v1172
        %v1174 = vpop.f32.mrf.mxu0
        %v1175 = vadd.f32 0.0, %v1174
        %1176 = vmatmul.bf16.gmra.mxu0 %v1153
        %v1177 = vpop.f32.mrf.mxu0
        %v1178 = vadd.f32 0.0, %v1177
        %v1179 = vpop.f32.mrf.mxu0
        %v1180 = vadd.f32 0.0, %v1179
        %1181 = vmatmul.bf16.gmra.mxu0 %v1156
        %v1182 = vpop.f32.mrf.mxu0
        %v1183 = vadd.f32 0.0, %v1182
        %v1184 = vpop.f32.mrf.mxu0
        %v1185 = vadd.f32 0.0, %v1184
        %1186 = vdwg.mxu0
        %v1187 = vperm.slane %v228, 0
        %v1188 = vmul.f32 %v1168, %v1187
        %v1189 = vmul.f32 %v1170, %v1187
        %v1190 = vmul.f32 %v1173, %v1187
        %v1191 = vmul.f32 %v1175, %v1187
        %v1192 = vmul.f32 %v1178, %v1187
        %v1193 = vmul.f32 %v1180, %v1187
        %v1194 = vmul.f32 %v1183, %v1187
        %v1195 = vmul.f32 %v1185, %v1187
        %v1196 = vperm.slane %v229, 0
        %v1197 = vadd.f32 %v1188, %v1196
        %v1198 = vadd.f32 %v1189, %v1196
        %v1199 = vadd.f32 %v1190, %v1196
        %v1200 = vadd.f32 %v1191, %v1196
        %v1201 = vadd.f32 %v1192, %v1196
        %v1202 = vadd.f32 %v1193, %v1196
        %v1203 = vadd.f32 %v1194, %v1196
        %v1204 = vadd.f32 %v1195, %v1196
        %v1205 = vunpack.c.l.bf16 %v230
        %v1206 = vunpack.c.l.bf16 %v231
        %v1207 = vunpack.c.l.bf16 %v232
        %v1208 = vunpack.c.l.bf16 %v233
        %v1209 = vunpack.c.l.bf16 %v234
        %v1210 = vunpack.c.l.bf16 %v235
        %v1211 = vunpack.c.l.bf16 %v236
        %v1212 = vunpack.c.l.bf16 %v237
        %v1213 = vadd.f32 %v1197, %v1205
        %v1214 = vadd.f32 %v1198, %v1206
        %v1215 = vadd.f32 %v1199, %v1207
        %v1216 = vadd.f32 %v1200, %v1208
        %v1217 = vadd.f32 %v1201, %v1209
        %v1218 = vadd.f32 %v1202, %v1210
        %v1219 = vadd.f32 %v1203, %v1211
        %v1220 = vadd.f32 %v1204, %v1212
        %v1221 = vmax.f32 %v1213, 0.0
        %v1222 = vmax.f32 %v1214, 0.0
        %v1223 = vmax.f32 %v1215, 0.0
        %v1224 = vmax.f32 %v1216, 0.0
        %v1225 = vmax.f32 %v1217, 0.0
        %v1226 = vmax.f32 %v1218, 0.0
        %v1227 = vmax.f32 %v1219, 0.0
        %v1228 = vmax.f32 %v1220, 0.0
        %v1229 = vpack.c.bf16 %v1221, %v1221
        %v1230 = vpack.c.bf16 %v1222, %v1222
        %v1231 = vpack.c.bf16 %v1223, %v1223
        %v1232 = vpack.c.bf16 %v1224, %v1224
        %v1233 = vpack.c.bf16 %v1225, %v1225
        %v1234 = vpack.c.bf16 %v1226, %v1226
        %v1235 = vpack.c.bf16 %v1227, %v1227
        %v1236 = vpack.c.bf16 %v1228, %v1228
        %1237 = vst [vmem:[%s217] sm:$0xf] %v1229
        %1238 = vst [vmem:[%s217 + $0x4] sm:$0xf] %v1230
        %1239 = vst [vmem:[%s217 + $0x8] sm:$0xf] %v1231
        %1240 = vst [vmem:[%s217 + $0xc] sm:$0xf] %v1232
        %1241 = vst [vmem:[%s217 + $0x10] sm:$0xf] %v1233
        %1242 = vst [vmem:[%s217 + $0x14] sm:$0xf] %v1234
        %1243 = vst [vmem:[%s217 + $0x18] sm:$0xf] %v1235
        %1244 = vst [vmem:[%s217 + $0x1c] sm:$0xf] %v1236
        %s1245 = sand.u32 %s137, 1
        %s1246 = scalar_lea.sflag [#allocation3], %s1245
        %s1247 = sand.u32 %s137, 1
        %s1248 = smul.addr %s1247, 32
        %s1249 = scalar_lea.vmem [#allocation2], %s1248
        // Predicated region
        $region41: #{_lambda_.1} parent=39 // pred_check
          %p1250 = pneg %p147
        $region42: #{_lambda_.1} parent=39 // pred_check_branch
          %1252 = sbr.rel (%p1250) target = $region44
        $region43: #{_lambda_.1} parent=39 // pred_region
          %1254 = vsyncadd %s1246, 0
          %s1255 = smul.addr %s19, 8
          %s1256 = smul.addr %s1255, 4
          %s1257 = scalar_lea.hbm %s5, %s1256
          %s1258 = sshll.u32 %s1249, 4
          %s1259 = int_to_ptr.vmem [resolvable:$true] %s1258
          %s1260 = sshll.u32 %s1257, 4
          %s1261 = int_to_ptr.hbm [resolvable:$true] %s1260
          %1266 = dma.vmem_to_hbm [thread:$0]  %s1259, 512, %s1261, %s1246, 64, 64, 4
        $region44: #{_lambda_.1} parent=39 // pred_fallthru
          _
      $region40: #{_lambda_.1} parent=5 // pred_fallthru
        _
      %p1267 = scmp.le.s32.totalorder 2, %s14
      // Predicated region
      $region45: #{_lambda_.1} parent=5 // pred_check
        %p1268 = pneg %p1267
      $region46: #{_lambda_.1} parent=5 // pred_check_branch
        %1270 = sbr.rel (%p1268) target = $region48
      $region47: #{_lambda_.1} parent=5 // pred_region
        %s1271 = ssub.s32 %s14, 2
        // Predicated region
        $region49: #{_lambda_.1} parent=47 // pred_check
          %p1272 = pneg %p153
        $region50: #{_lambda_.1} parent=47 // pred_check_branch
          %1274 = sbr.rel (%p1272) target = $region52
        $region51: #{_lambda_.1} parent=47 // pred_region
          %s1275 = sand.u32 %s138, 1
          %s1276 = scalar_lea.sflag [#allocation3], %s1275
          %s1277 = sand.u32 %s138, 1
          %s1278 = smul.addr %s1277, 32
          %s1279 = scalar_lea.vmem [#allocation2], %s1278
          %1281 = dma.done %s1276, 512
        $region52: #{_lambda_.1} parent=47 // pred_fallthru
          _
      $region48: #{_lambda_.1} parent=5 // pred_fallthru
        _
    $region6: #{_lambda_.1} parent=1 // loop_footer
      %s18 = sadd.s32 1, %s14
    $region7: #{_lambda_.1} parent=1 // loop_footer_branch
      %13 = sbr.rel target = $region3
    $region8: #{_lambda_.1} parent=1 // loop_exit
      _
    %1282 = vsyncpa [#allocation3], 1
    %s1283 = scalar_lea.sflag [#allocation3], 1
    %1284 = vsyncpa %s1283, 1

</llo_original>
